<compile_context>
chip_gen: v5e
topology: v5e:2x2
jax: 0.10.0
libtpu: 0.0.40
codegen_flags: <defaults>
</compile_context>

<pallas_src>
import jax
import jax.numpy as jnp
from jax.experimental import pallas as pl
from jax.experimental.pallas import tpu as pltpu

F1, F2 = 16, 16          # feature_dim1, feature_dim2
D = F1 * F2              # flattened feature dim
H = 128                  # hidden width
M = 64                   # latent dim  -> encoder output dim = 2M = 128
B = 8                    # example batch size


def gaussian_encoder_kernel(x_ref, w1_ref, b1_ref, w2_ref, b2_ref, w3_ref, b3_ref,
                            out_ref):
    # f32 -> bf16 cast on the VPU (x is DMA'd as f32; cast is free in a DMA-bound regime).
    x = x_ref[...].astype(jnp.bfloat16)                                # (tb, D)

    # Linear(D, H) + ReLU   (bf16 MXU inputs, f32 accumulation)
    h1 = jnp.dot(x, w1_ref[...], preferred_element_type=jnp.float32) + b1_ref[...]
    h1 = jnp.maximum(h1, 0.0).astype(jnp.bfloat16)

    # Linear(H, H) + ReLU
    h2 = jnp.dot(h1, w2_ref[...], preferred_element_type=jnp.float32) + b2_ref[...]
    h2 = jnp.maximum(h2, 0.0).astype(jnp.bfloat16)

    # Linear(H, 2M) + bias; exp only on the raw_std half via a lane-iota select so the
    # store stays one unmasked 128-lane vst (the chunk happens for free in the wrapper).
    out = jnp.dot(h2, w3_ref[...], preferred_element_type=jnp.float32) + b3_ref[...]
    col = jax.lax.broadcasted_iota(jnp.int32, out.shape, 1)
    out_ref[...] = jnp.where(col < M, out, jnp.exp(out)).astype(out_ref.dtype)
    # TODO(synk): td.Independent(td.Normal(...), 1) distribution object has no Pallas
    # equivalent; the kernel returns its parameters (mean, std) instead.


def _pick_batch_tile(b, tb_max):
    """Per-step batch tile: big tiles amortize the ~0.35us fixed per-grid-step overhead,
    but keep grid >= 2 whenever the batch allows it so the "parallel" batch axis can
    shard across v7x's two TensorCores. Tiles are multiples of 8 (sublane) unless a
    single tile covers the whole batch (full-array blocks are always legal)."""
    if b <= 16:                       # too small to split usefully; launch-bound anyway
        return b
    half = pl.cdiv(b, 2)
    tb = min(tb_max, ((half + 7) // 8) * 8)
    return max(tb, 8)


def gaussian_encoder(x, w1, b1, w2, b2, w3, b3, *, tb_max=1024,
                     out_dtype=jnp.float32):
    """x: (batch, F1, F2) f32; weight matrices ideally already bf16.
    Returns (mean, std), each (batch, M) in out_dtype."""
    b = x.shape[0]
    x2 = x.reshape(b, -1)            # nn.Flatten: free metadata reshape; stays f32

    # No-ops when the caller already stores the weight matrices in bf16 (recommended).
    w1b = w1.astype(jnp.bfloat16)
    w2b = w2.astype(jnp.bfloat16)
    w3b = w3.astype(jnp.bfloat16)

    tb = _pick_batch_tile(b, tb_max)
    grid = (pl.cdiv(b, tb),)         # ragged last block masked on writeback (no padding)

    flops = 2 * b * (D * H + H * H + H * 2 * M)
    bytes_accessed = (x2.size * 4
                      + (w1b.size + w2b.size + w3b.size) * 2
                      + (b1.size + b2.size + b3.size) * 4
                      + b * 2 * M * jnp.dtype(out_dtype).itemsize)

    out = pl.pallas_call(
        gaussian_encoder_kernel,
        out_shape=jax.ShapeDtypeStruct((b, 2 * M), out_dtype),
        grid_spec=pl.GridSpec(
            grid=grid,
            in_specs=[
                pl.BlockSpec((tb, D), lambda i: (i, 0)),       # x tile (f32)
                pl.BlockSpec((D, H), lambda i: (0, 0)),        # w1 (VMEM-resident)
                pl.BlockSpec((1, H), lambda i: (0, 0)),        # b1
                pl.BlockSpec((H, H), lambda i: (0, 0)),        # w2
                pl.BlockSpec((1, H), lambda i: (0, 0)),        # b2
                pl.BlockSpec((H, 2 * M), lambda i: (0, 0)),    # w3
                pl.BlockSpec((1, 2 * M), lambda i: (0, 0)),    # b3
            ],
            out_specs=pl.BlockSpec((tb, 2 * M), lambda i: (i, 0)),
        ),
        compiler_params=pltpu.CompilerParams(
            dimension_semantics=("parallel",),
            vmem_limit_bytes=32 * 1024 * 1024),   # covers tb up to ~2048 even on v5e
        cost_estimate=pl.CostEstimate(flops=flops,
                                      transcendentals=b * 2 * M,
                                      bytes_accessed=bytes_accessed),
    )(x2, w1b, b1, w2b, b2, w3b, b3)

    return out[:, :M], out[:, M:]      # free chunk: (mean, std=exp(raw_std))


def _ref(x, w1, b1, w2, b2, w3, b3):
    # Reference with the same bf16 MXU inputs / f32 accumulation as the kernel.
    x2 = x.reshape(x.shape[0], -1).astype(jnp.bfloat16)
    w1b, w2b, w3b = (w.astype(jnp.bfloat16) for w in (w1, w2, w3))
    h1 = jnp.maximum(jnp.dot(x2, w1b, preferred_element_type=jnp.float32) + b1, 0.0
                     ).astype(jnp.bfloat16)
    h2 = jnp.maximum(jnp.dot(h1, w2b, preferred_element_type=jnp.float32) + b2, 0.0
                     ).astype(jnp.bfloat16)
    out = jnp.dot(h2, w3b, preferred_element_type=jnp.float32) + b3
    return out[:, :M], jnp.exp(out[:, M:])


if __name__ == "__main__":
    key = jax.random.PRNGKey(0)
    kx, k1, k2, k3, kb1, kb2, kb3, kxr = jax.random.split(key, 8)

    x = jax.random.normal(kx, (B, F1, F2), dtype=jnp.float32)

    # Deterministic parameter init (synthetic, small scale to keep exp() tame).
    w1 = jax.random.normal(k1, (D, H), dtype=jnp.float32) * 0.05
    b1 = jax.random.normal(kb1, (1, H), dtype=jnp.float32) * 0.05
    w2 = jax.random.normal(k2, (H, H), dtype=jnp.float32) * 0.05
    b2 = jax.random.normal(kb2, (1, H), dtype=jnp.float32) * 0.05
    w3 = jax.random.normal(k3, (H, 2 * M), dtype=jnp.float32) * 0.05
    b3 = jax.random.normal(kb3, (1, 2 * M), dtype=jnp.float32) * 0.05

    # Store weight matrices in bf16 once (no per-call casts inside the wrapper).
    w1b, w2b, w3b = (w.astype(jnp.bfloat16) for w in (w1, w2, w3))

    # 1) Default path: f32 output, small batch -> single full-batch tile.
    mean, std = jax.block_until_ready(gaussian_encoder(x, w1b, b1, w2b, b2, w3b, b3))
    mean_ref, std_ref = _ref(x, w1, b1, w2, b2, w3, b3)
    assert mean.shape == (B, M) and std.shape == (B, M)
    assert jnp.allclose(mean, mean_ref, atol=1e-3, rtol=1e-3)
    assert jnp.allclose(std, std_ref, atol=1e-3, rtol=1e-3)

    # 2) Ragged multi-tile path (batch=20 -> tb=16, grid=2, last block masked writeback).
    Br = 20
    xr = jax.random.normal(kxr, (Br, F1, F2), dtype=jnp.float32)
    mean_r, std_r = jax.block_until_ready(
        gaussian_encoder(xr, w1b, b1, w2b, b2, w3b, b3))
    mean_rr, std_rr = _ref(xr, w1, b1, w2, b2, w3, b3)
    assert mean_r.shape == (Br, M) and std_r.shape == (Br, M)
    assert jnp.allclose(mean_r, mean_rr, atol=1e-3, rtol=1e-3)
    assert jnp.allclose(std_r, std_rr, atol=1e-3, rtol=1e-3)

    # 3) Optional bf16-output path (halves store traffic; looser bf16 tolerance).
    mean_h, std_h = jax.block_until_ready(
        gaussian_encoder(x, w1b, b1, w2b, b2, w3b, b3, out_dtype=jnp.bfloat16))
    assert jnp.allclose(mean_h.astype(jnp.float32), mean_ref, atol=2e-2, rtol=2e-2)
    assert jnp.allclose(std_h.astype(jnp.float32), std_ref, atol=2e-2, rtol=2e-2)

    print("KERNEL_OK")
</pallas_src>

<mosaic_0001>
module attributes {stable_mosaic.version = 11 : i64} {
  func.func @gaussian_encoder_kernel(%arg0: i32, %arg1: memref<8x256xf32, #tpu.memory_space<vmem>>, %arg2: memref<256x128xbf16, #tpu.memory_space<vmem>>, %arg3: memref<1x128xf32, #tpu.memory_space<vmem>>, %arg4: memref<128x128xbf16, #tpu.memory_space<vmem>>, %arg5: memref<1x128xf32, #tpu.memory_space<vmem>>, %arg6: memref<128x128xbf16, #tpu.memory_space<vmem>>, %arg7: memref<1x128xf32, #tpu.memory_space<vmem>>, %arg8: memref<8x128xf32, #tpu.memory_space<vmem>>) attributes {dimension_semantics = [#tpu.dimension_semantics<parallel>], iteration_bounds = array<i64: 1>, scalar_prefetch = 0 : i64, scratch_operands = 0 : i64, tpu.core_type = #tpu.core_type<tc>, window_params = [{transform_indices = @transform_0, window_bounds = array<i64: 8, 256>}, {pipeline_mode = #tpu.pipeline_mode<synchronous>, transform_indices = @transform_1, window_bounds = array<i64: 256, 128>}, {pipeline_mode = #tpu.pipeline_mode<synchronous>, transform_indices = @transform_2, window_bounds = array<i64: 1, 128>}, {pipeline_mode = #tpu.pipeline_mode<synchronous>, transform_indices = @transform_3, window_bounds = array<i64: 128, 128>}, {pipeline_mode = #tpu.pipeline_mode<synchronous>, transform_indices = @transform_4, window_bounds = array<i64: 1, 128>}, {pipeline_mode = #tpu.pipeline_mode<synchronous>, transform_indices = @transform_5, window_bounds = array<i64: 128, 128>}, {pipeline_mode = #tpu.pipeline_mode<synchronous>, transform_indices = @transform_6, window_bounds = array<i64: 1, 128>}, {transform_indices = @transform_7, window_bounds = array<i64: 8, 128>}]} {
    %c0 = arith.constant 0 : index
    %c0_0 = arith.constant 0 : index
    %0 = vector.load %arg1[%c0, %c0_0] : memref<8x256xf32, #tpu.memory_space<vmem>>, vector<8x256xf32>
    %1 = arith.truncf %0 : vector<8x256xf32> to vector<8x256xbf16>
    %c0_1 = arith.constant 0 : index
    %c0_2 = arith.constant 0 : index
    %2 = vector.load %arg2[%c0_1, %c0_2] : memref<256x128xbf16, #tpu.memory_space<vmem>>, vector<256x128xbf16>
    %cst = arith.constant dense<0.000000e+00> : vector<8x128xf32>
    %3 = tpu.matmul %1, %2, %cst {dimension_numbers = #tpu.dot_dimension_numbers<[1], [0], [0], [1], [0, 0, 1, 1], [], []>} : vector<8x256xbf16>, vector<256x128xbf16>, vector<8x128xf32> -> vector<8x128xf32>
    %c0_3 = arith.constant 0 : index
    %c0_4 = arith.constant 0 : index
    %4 = vector.load %arg3[%c0_3, %c0_4] : memref<1x128xf32, #tpu.memory_space<vmem>>, vector<1x128xf32>
    %5 = vector.broadcast %4 : vector<1x128xf32> to vector<8x128xf32>
    %6 = arith.addf %3, %5 : vector<8x128xf32>
    %cst_5 = arith.constant 0.000000e+00 : f32
    %7 = vector.broadcast %cst_5 : f32 to vector<8x128xf32>
    %8 = arith.maximumf %6, %7 : vector<8x128xf32>
    %9 = arith.truncf %8 : vector<8x128xf32> to vector<8x128xbf16>
    %c0_6 = arith.constant 0 : index
    %c0_7 = arith.constant 0 : index
    %10 = vector.load %arg4[%c0_6, %c0_7] : memref<128x128xbf16, #tpu.memory_space<vmem>>, vector<128x128xbf16>
    %cst_8 = arith.constant dense<0.000000e+00> : vector<8x128xf32>
    %11 = tpu.matmul %9, %10, %cst_8 {dimension_numbers = #tpu.dot_dimension_numbers<[1], [0], [0], [1], [0, 0, 1, 1], [], []>} : vector<8x128xbf16>, vector<128x128xbf16>, vector<8x128xf32> -> vector<8x128xf32>
    %c0_9 = arith.constant 0 : index
    %c0_10 = arith.constant 0 : index
    %12 = vector.load %arg5[%c0_9, %c0_10] : memref<1x128xf32, #tpu.memory_space<vmem>>, vector<1x128xf32>
    %13 = vector.broadcast %12 : vector<1x128xf32> to vector<8x128xf32>
    %14 = arith.addf %11, %13 : vector<8x128xf32>
    %cst_11 = arith.constant 0.000000e+00 : f32
    %15 = vector.broadcast %cst_11 : f32 to vector<8x128xf32>
    %16 = arith.maximumf %14, %15 : vector<8x128xf32>
    %17 = arith.truncf %16 : vector<8x128xf32> to vector<8x128xbf16>
    %c0_12 = arith.constant 0 : index
    %c0_13 = arith.constant 0 : index
    %18 = vector.load %arg6[%c0_12, %c0_13] : memref<128x128xbf16, #tpu.memory_space<vmem>>, vector<128x128xbf16>
    %cst_14 = arith.constant dense<0.000000e+00> : vector<8x128xf32>
    %19 = tpu.matmul %17, %18, %cst_14 {dimension_numbers = #tpu.dot_dimension_numbers<[1], [0], [0], [1], [0, 0, 1, 1], [], []>} : vector<8x128xbf16>, vector<128x128xbf16>, vector<8x128xf32> -> vector<8x128xf32>
    %c0_15 = arith.constant 0 : index
    %c0_16 = arith.constant 0 : index
    %20 = vector.load %arg7[%c0_15, %c0_16] : memref<1x128xf32, #tpu.memory_space<vmem>>, vector<1x128xf32>
    %21 = vector.broadcast %20 : vector<1x128xf32> to vector<8x128xf32>
    %22 = arith.addf %19, %21 : vector<8x128xf32>
    %23 = tpu.iota {dimensions = array<i32: 1>} : vector<8x128xi32>
    %c64_i32 = arith.constant 64 : i32
    %24 = vector.broadcast %c64_i32 : i32 to vector<8x128xi32>
    %25 = arith.cmpi slt, %23, %24 : vector<8x128xi32>
    %26 = math.exp %22 : vector<8x128xf32>
    %27 = arith.select %25, %22, %26 : vector<8x128xi1>, vector<8x128xf32>
    %c0_17 = arith.constant 0 : index
    %c0_18 = arith.constant 0 : index
    %28 = vector.load %arg8[%c0_17, %c0_18] : memref<8x128xf32, #tpu.memory_space<vmem>>, vector<8x128xf32>
    tpu.vector_store %arg8[%c0_17, %c0_18], %27 {strides = array<i32>} : memref<8x128xf32, #tpu.memory_space<vmem>>, vector<8x128xf32>,
    return
  }
  func.func @transform_0(%arg0: i32) -> (i32, i32) {
    %c0_i32 = arith.constant 0 : i32
    %c0_i32_0 = arith.constant 0 : i32
    return %arg0, %c0_i32 : i32, i32
  }
  func.func @transform_1(%arg0: i32) -> (i32, i32) {
    %c0_i32 = arith.constant 0 : i32
    %c0_i32_0 = arith.constant 0 : i32
    %c0_i32_1 = arith.constant 0 : i32
    return %c0_i32, %c0_i32_0 : i32, i32
  }
  func.func @transform_2(%arg0: i32) -> (i32, i32) {
    %c0_i32 = arith.constant 0 : i32
    %c0_i32_0 = arith.constant 0 : i32
    %c0_i32_1 = arith.constant 0 : i32
    return %c0_i32, %c0_i32_0 : i32, i32
  }
  func.func @transform_3(%arg0: i32) -> (i32, i32) {
    %c0_i32 = arith.constant 0 : i32
    %c0_i32_0 = arith.constant 0 : i32
    %c0_i32_1 = arith.constant 0 : i32
    return %c0_i32, %c0_i32_0 : i32, i32
  }
  func.func @transform_4(%arg0: i32) -> (i32, i32) {
    %c0_i32 = arith.constant 0 : i32
    %c0_i32_0 = arith.constant 0 : i32
    %c0_i32_1 = arith.constant 0 : i32
    return %c0_i32, %c0_i32_0 : i32, i32
  }
  func.func @transform_5(%arg0: i32) -> (i32, i32) {
    %c0_i32 = arith.constant 0 : i32
    %c0_i32_0 = arith.constant 0 : i32
    %c0_i32_1 = arith.constant 0 : i32
    return %c0_i32, %c0_i32_0 : i32, i32
  }
  func.func @transform_6(%arg0: i32) -> (i32, i32) {
    %c0_i32 = arith.constant 0 : i32
    %c0_i32_0 = arith.constant 0 : i32
    %c0_i32_1 = arith.constant 0 : i32
    return %c0_i32, %c0_i32_0 : i32, i32
  }
  func.func @transform_7(%arg0: i32) -> (i32, i32) {
    %c0_i32 = arith.constant 0 : i32
    %c0_i32_0 = arith.constant 0 : i32
    return %arg0, %c0_i32 : i32, i32
  }
}

</mosaic_0001>

<llo_original>
// kernel: tpu_custom_call.1
$region0: #{tpu_custom_call.1}
  #allocation0 [shape = 'u32[]', space=smem, size = 0x4, offset = 0x4, fixed_abs, tag = 'smem constant byte address 0x4 - core index']
  #allocation1 [shape = 'u32[72,128]{1,0:T(1,128)}', space=vmem, size = 0x9000, scoped, tag = 'internal scratch']
  %s0 = inlined_call_operand.hbm [shape: f32[8,256], index: 0, kind: input, shape index: {}]
  %s1 = inlined_call_operand.hbm [shape: bf16[256,128], index: 1, kind: input, shape index: {}]
  %s2 = inlined_call_operand.vmem [shape: f32[1,128], index: 2, kind: input, shape index: {}]
  %s3 = inlined_call_operand.hbm [shape: bf16[128,128], index: 3, kind: input, shape index: {}]
  %s4 = inlined_call_operand.vmem [shape: f32[1,128], index: 4, kind: input, shape index: {}]
  %s5 = inlined_call_operand.hbm [shape: bf16[128,128], index: 5, kind: input, shape index: {}]
  %s6 = inlined_call_operand.vmem [shape: f32[1,128], index: 6, kind: input, shape index: {}]
  %s7 = inlined_call_operand.hbm [shape: f32[8,128], index: 7, kind: output, shape index: {}]
  %s8 = sld [smem:[#allocation0]]
  $region54: #{tpu_custom_call.1} parent=0
    _
  %s10 = ssub.s32 1, %s8
  %s11 = scalar_select 0, %s10, %s8
  $region1: #{tpu_custom_call.1} parent=0
    #allocation2 [shape = 'u8[8192]{0}', space=vmem, size = 0x2000, scoped, tag = 'input window, operand 0, single buffered']
    #allocation3 [shape = 's32[1]{0}', space=sflag, size = 0x4, scoped, tag = 'scoped memory for tpu_custom_call.1']
    #allocation4 [shape = 's32[1]{0}', space=sflag, size = 0x4, scoped, tag = 'scoped memory for tpu_custom_call.1']
    #allocation5 [shape = 'u8[65536]{0}', space=vmem, size = 0x10000, scoped, tag = 'input window, operand 1, single buffered']
    #allocation6 [shape = 's32[1]{0}', space=sflag, size = 0x4, scoped, tag = 'scoped memory for tpu_custom_call.1']
    #allocation7 [shape = 'u8[32768]{0}', space=vmem, size = 0x8000, scoped, tag = 'input window, operand 3, single buffered']
    #allocation8 [shape = 'u8[32768]{0}', space=vmem, size = 0x8000, scoped, tag = 'input window, operand 5, single buffered']
    #allocation9 [shape = 's32[1]{0}', space=sflag, size = 0x4, scoped, tag = 'scoped memory for tpu_custom_call.1']
    #allocation10 [shape = 'u8[4096]{0}', space=vmem, size = 0x1000, scoped, tag = 'output window, operand 0, single buffered']
    %12 = vsyncpa [#allocation3], 0
    %13 = vsyncpa [#allocation6], 0
    %14 = vsyncpa [#allocation9], 0
    %15 = vsyncpa [#allocation4], 0
    // Predicated region
    $region2: #{tpu_custom_call.1} parent=1 // pred_check
      _
    $region3: #{tpu_custom_call.1} parent=1 // pred_check_branch
      %17 = sbr.rel (0) target = $region5
    $region4: #{tpu_custom_call.1} parent=1 // pred_region
      %19 = vsyncadd [#allocation3], 0
      %s21 = sshll.u32 %s0, 4
      %s22 = int_to_ptr.hbm [resolvable:$true] %s21
      %s23 = sshll.u32 [#allocation2], 4
      %s24 = int_to_ptr.vmem [resolvable:$true] %s23
      %26 = dma.hbm_to_vmem [thread:$0]  %s22, 256, %s24, [#allocation3]
    $region5: #{tpu_custom_call.1} parent=1 // pred_fallthru
      _
    // Predicated region
    $region6: #{tpu_custom_call.1} parent=1 // pred_check
      _
    $region7: #{tpu_custom_call.1} parent=1 // pred_check_branch
      %28 = sbr.rel (0) target = $region9
    $region8: #{tpu_custom_call.1} parent=1 // pred_region
      %30 = vsyncadd [#allocation6], 0
      %s31 = sshll.u32 %s1, 4
      %s32 = int_to_ptr.hbm [resolvable:$true] %s31
      %s33 = sshll.u32 [#allocation5], 4
      %s34 = int_to_ptr.vmem [resolvable:$true] %s33
      %39 = dma.hbm_to_vmem [thread:$0]  %s32, 2048, %s34, [#allocation6], 64, 64, 4
    $region9: #{tpu_custom_call.1} parent=1 // pred_fallthru
      _
    // Predicated region
    $region10: #{tpu_custom_call.1} parent=1 // pred_check
      _
    $region11: #{tpu_custom_call.1} parent=1 // pred_check_branch
      %41 = sbr.rel (0) target = $region13
    $region12: #{tpu_custom_call.1} parent=1 // pred_region
      _
    $region13: #{tpu_custom_call.1} parent=1 // pred_fallthru
      _
    // Predicated region
    $region14: #{tpu_custom_call.1} parent=1 // pred_check
      _
    $region15: #{tpu_custom_call.1} parent=1 // pred_check_branch
      %43 = sbr.rel (0) target = $region17
    $region16: #{tpu_custom_call.1} parent=1 // pred_region
      %45 = vsyncadd [#allocation6], 0
      %s46 = sshll.u32 %s3, 4
      %s47 = int_to_ptr.hbm [resolvable:$true] %s46
      %s48 = sshll.u32 [#allocation7], 4
      %s49 = int_to_ptr.vmem [resolvable:$true] %s48
      %54 = dma.hbm_to_vmem [thread:$0]  %s47, 1024, %s49, [#allocation6], 64, 64, 4
    $region17: #{tpu_custom_call.1} parent=1 // pred_fallthru
      _
    // Predicated region
    $region18: #{tpu_custom_call.1} parent=1 // pred_check
      _
    $region19: #{tpu_custom_call.1} parent=1 // pred_check_branch
      %56 = sbr.rel (0) target = $region21
    $region20: #{tpu_custom_call.1} parent=1 // pred_region
      _
    $region21: #{tpu_custom_call.1} parent=1 // pred_fallthru
      _
    // Predicated region
    $region22: #{tpu_custom_call.1} parent=1 // pred_check
      _
    $region23: #{tpu_custom_call.1} parent=1 // pred_check_branch
      %58 = sbr.rel (0) target = $region25
    $region24: #{tpu_custom_call.1} parent=1 // pred_region
      %60 = vsyncadd [#allocation9], 0
      %s61 = sshll.u32 %s5, 4
      %s62 = int_to_ptr.hbm [resolvable:$true] %s61
      %s63 = sshll.u32 [#allocation8], 4
      %s64 = int_to_ptr.vmem [resolvable:$true] %s63
      %69 = dma.hbm_to_vmem [thread:$0]  %s62, 1024, %s64, [#allocation9], 64, 64, 4
    $region25: #{tpu_custom_call.1} parent=1 // pred_fallthru
      _
    // Predicated region
    $region26: #{tpu_custom_call.1} parent=1 // pred_check
      _
    $region27: #{tpu_custom_call.1} parent=1 // pred_check_branch
      %71 = sbr.rel (0) target = $region29
    $region28: #{tpu_custom_call.1} parent=1 // pred_region
      _
    $region29: #{tpu_custom_call.1} parent=1 // pred_fallthru
      _
    // Predicated region
    $region30: #{tpu_custom_call.1} parent=1 // pred_check
      _
    $region31: #{tpu_custom_call.1} parent=1 // pred_check_branch
      %73 = sbr.rel (0) target = $region33
    $region32: #{tpu_custom_call.1} parent=1 // pred_region
      %75 = dma.done [#allocation3], 256
    $region33: #{tpu_custom_call.1} parent=1 // pred_fallthru
      _
    // Predicated region
    $region34: #{tpu_custom_call.1} parent=1 // pred_check
      _
    $region35: #{tpu_custom_call.1} parent=1 // pred_check_branch
      %77 = sbr.rel (0) target = $region37
    $region36: #{tpu_custom_call.1} parent=1 // pred_region
      %79 = dma.done [#allocation6], 2048
    $region37: #{tpu_custom_call.1} parent=1 // pred_fallthru
      _
    // Predicated region
    $region38: #{tpu_custom_call.1} parent=1 // pred_check
      _
    $region39: #{tpu_custom_call.1} parent=1 // pred_check_branch
      %81 = sbr.rel (0) target = $region41
    $region40: #{tpu_custom_call.1} parent=1 // pred_region
      %83 = dma.done [#allocation6], 1024
    $region41: #{tpu_custom_call.1} parent=1 // pred_fallthru
      _
    // Predicated region
    $region42: #{tpu_custom_call.1} parent=1 // pred_check
      _
    $region43: #{tpu_custom_call.1} parent=1 // pred_check_branch
      %85 = sbr.rel (0) target = $region45
    $region44: #{tpu_custom_call.1} parent=1 // pred_region
      %87 = dma.done [#allocation9], 1024
    $region45: #{tpu_custom_call.1} parent=1 // pred_fallthru
      _
    %v88 = vld [vmem:[#allocation2] sm:$0xff]
    %v89 = vld [vmem:[#allocation2 + $0x8] sm:$0xff]
    %v90 = vpack.c.bf16 %v88, %v88
    %v91 = vpack.c.bf16 %v89, %v89
    %v92 = vld [vmem:[#allocation5] sm:$0xf]
    %v93 = vld [vmem:[#allocation5 + $0x4] sm:$0xf]
    %v94 = vld [vmem:[#allocation5 + $0x8] sm:$0xf]
    %v95 = vld [vmem:[#allocation5 + $0xc] sm:$0xf]
    %v96 = vld [vmem:[#allocation5 + $0x10] sm:$0xf]
    %v97 = vld [vmem:[#allocation5 + $0x14] sm:$0xf]
    %v98 = vld [vmem:[#allocation5 + $0x18] sm:$0xf]
    %v99 = vld [vmem:[#allocation5 + $0x1c] sm:$0xf]
    %v100 = vld [vmem:[#allocation5 + $0x20] sm:$0xf]
    %v101 = vld [vmem:[#allocation5 + $0x24] sm:$0xf]
    %v102 = vld [vmem:[#allocation5 + $0x28] sm:$0xf]
    %v103 = vld [vmem:[#allocation5 + $0x2c] sm:$0xf]
    %v104 = vld [vmem:[#allocation5 + $0x30] sm:$0xf]
    %v105 = vld [vmem:[#allocation5 + $0x34] sm:$0xf]
    %v106 = vld [vmem:[#allocation5 + $0x38] sm:$0xf]
    %v107 = vld [vmem:[#allocation5 + $0x3c] sm:$0xf]
    %v108 = vld [vmem:[#allocation5 + $0x40] sm:$0xf]
    %v109 = vld [vmem:[#allocation5 + $0x44] sm:$0xf]
    %v110 = vld [vmem:[#allocation5 + $0x48] sm:$0xf]
    %v111 = vld [vmem:[#allocation5 + $0x4c] sm:$0xf]
    %v112 = vld [vmem:[#allocation5 + $0x50] sm:$0xf]
    %v113 = vld [vmem:[#allocation5 + $0x54] sm:$0xf]
    %v114 = vld [vmem:[#allocation5 + $0x58] sm:$0xf]
    %v115 = vld [vmem:[#allocation5 + $0x5c] sm:$0xf]
    %v116 = vld [vmem:[#allocation5 + $0x60] sm:$0xf]
    %v117 = vld [vmem:[#allocation5 + $0x64] sm:$0xf]
    %v118 = vld [vmem:[#allocation5 + $0x68] sm:$0xf]
    %v119 = vld [vmem:[#allocation5 + $0x6c] sm:$0xf]
    %v120 = vld [vmem:[#allocation5 + $0x70] sm:$0xf]
    %v121 = vld [vmem:[#allocation5 + $0x74] sm:$0xf]
    %v122 = vld [vmem:[#allocation5 + $0x78] sm:$0xf]
    %v123 = vld [vmem:[#allocation5 + $0x7c] sm:$0xf]
    %v124 = vld [vmem:[%s2] sm:$0x1]
    %v126 = vperm.slane %v124, 0
    %v160 = vunpack.c.l.b16 %v92
    %v161 = vunpack.c.l.b16 %v93
    %v162 = vunpack.c.l.b16 %v94
    %v163 = vunpack.c.l.b16 %v95
    %v164 = vunpack.c.l.b16 %v96
    %v165 = vunpack.c.l.b16 %v97
    %v166 = vunpack.c.l.b16 %v98
    %v167 = vunpack.c.l.b16 %v99
    %v168 = vunpack.c.l.b16 %v100
    %v169 = vunpack.c.l.b16 %v101
    %v170 = vunpack.c.l.b16 %v102
    %v171 = vunpack.c.l.b16 %v103
    %v172 = vunpack.c.l.b16 %v104
    %v173 = vunpack.c.l.b16 %v105
    %v174 = vunpack.c.l.b16 %v106
    %v175 = vunpack.c.l.b16 %v107
    %v176 = vunpack.c.l.b16 %v108
    %v177 = vunpack.c.l.b16 %v109
    %v178 = vunpack.c.l.b16 %v110
    %v179 = vunpack.c.l.b16 %v111
    %v180 = vunpack.c.l.b16 %v112
    %v181 = vunpack.c.l.b16 %v113
    %v182 = vunpack.c.l.b16 %v114
    %v183 = vunpack.c.l.b16 %v115
    %v184 = vunpack.c.l.b16 %v116
    %v185 = vunpack.c.l.b16 %v117
    %v186 = vunpack.c.l.b16 %v118
    %v187 = vunpack.c.l.b16 %v119
    %v188 = vunpack.c.l.b16 %v120
    %v189 = vunpack.c.l.b16 %v121
    %v190 = vunpack.c.l.b16 %v122
    %v191 = vunpack.c.l.b16 %v123
    %v192 = vpack.c.b16 %v161, %v160
    %v193 = vpack.c.b16 %v163, %v162
    %v194 = vpack.c.b16 %v165, %v164
    %v195 = vpack.c.b16 %v167, %v166
    %v196 = vpack.c.b16 %v169, %v168
    %v197 = vpack.c.b16 %v171, %v170
    %v198 = vpack.c.b16 %v173, %v172
    %v199 = vpack.c.b16 %v175, %v174
    %v200 = vpack.c.b16 %v177, %v176
    %v201 = vpack.c.b16 %v179, %v178
    %v202 = vpack.c.b16 %v181, %v180
    %v203 = vpack.c.b16 %v183, %v182
    %v204 = vpack.c.b16 %v185, %v184
    %v205 = vpack.c.b16 %v187, %v186
    %v206 = vpack.c.b16 %v189, %v188
    %v207 = vpack.c.b16 %v191, %v190
    %224 = vmatpush.bf16.msra.mxu0 %v199
    %225 = vmatpush.bf16.msra.mxu0 %v198
    %226 = vmatpush.bf16.msra.mxu0 %v197
    %227 = vmatpush.bf16.msra.mxu0 %v196
    %228 = vmatpush.bf16.msra.mxu0 %v195
    %229 = vmatpush.bf16.msra.mxu0 %v194
    %230 = vmatpush.bf16.msra.mxu0 %v193
    %231 = vmatpush.bf16.msra.mxu0 %v192
    %232 = vmatmul.bf16.gmra.mxu0 %v90
    %v233 = vpop.f32.mrf.mxu0
    %v234 = vadd.f32 %v126, %v233
    %v235 = vpop.f32.mrf.mxu0
    %236 = vdwg.mxu0
    %237 = vmatpush.bf16.msra.mxu0 %v207
    %238 = vmatpush.bf16.msra.mxu0 %v206
    %239 = vmatpush.bf16.msra.mxu0 %v205
    %240 = vmatpush.bf16.msra.mxu0 %v204
    %241 = vmatpush.bf16.msra.mxu0 %v203
    %242 = vmatpush.bf16.msra.mxu0 %v202
    %243 = vmatpush.bf16.msra.mxu0 %v201
    %244 = vmatpush.bf16.msra.mxu0 %v200
    %245 = vmatmul.bf16.gmra.mxu0 %v91
    %v246 = vpop.f32.mrf.mxu0
    %v247 = vadd.f32 %v234, %v246
    %v248 = vpop.f32.mrf.mxu0
    %249 = vdwg.mxu0
    %v250 = vmax.f32 %v247, 0.0
    %v251 = vpack.c.bf16 %v250, %v250
    %v252 = vld [vmem:[#allocation7] sm:$0xf]
    %v253 = vld [vmem:[#allocation7 + $0x4] sm:$0xf]
    %v254 = vld [vmem:[#allocation7 + $0x8] sm:$0xf]
    %v255 = vld [vmem:[#allocation7 + $0xc] sm:$0xf]
    %v256 = vld [vmem:[#allocation7 + $0x10] sm:$0xf]
    %v257 = vld [vmem:[#allocation7 + $0x14] sm:$0xf]
    %v258 = vld [vmem:[#allocation7 + $0x18] sm:$0xf]
    %v259 = vld [vmem:[#allocation7 + $0x1c] sm:$0xf]
    %v260 = vld [vmem:[#allocation7 + $0x20] sm:$0xf]
    %v261 = vld [vmem:[#allocation7 + $0x24] sm:$0xf]
    %v262 = vld [vmem:[#allocation7 + $0x28] sm:$0xf]
    %v263 = vld [vmem:[#allocation7 + $0x2c] sm:$0xf]
    %v264 = vld [vmem:[#allocation7 + $0x30] sm:$0xf]
    %v265 = vld [vmem:[#allocation7 + $0x34] sm:$0xf]
    %v266 = vld [vmem:[#allocation7 + $0x38] sm:$0xf]
    %v267 = vld [vmem:[#allocation7 + $0x3c] sm:$0xf]
    %v268 = vld [vmem:[%s4] sm:$0x1]
    %v270 = vperm.slane %v268, 0
    %v288 = vunpack.c.l.b16 %v252
    %v289 = vunpack.c.l.b16 %v253
    %v290 = vunpack.c.l.b16 %v254
    %v291 = vunpack.c.l.b16 %v255
    %v292 = vunpack.c.l.b16 %v256
    %v293 = vunpack.c.l.b16 %v257
    %v294 = vunpack.c.l.b16 %v258
    %v295 = vunpack.c.l.b16 %v259
    %v296 = vunpack.c.l.b16 %v260
    %v297 = vunpack.c.l.b16 %v261
    %v298 = vunpack.c.l.b16 %v262
    %v299 = vunpack.c.l.b16 %v263
    %v300 = vunpack.c.l.b16 %v264
    %v301 = vunpack.c.l.b16 %v265
    %v302 = vunpack.c.l.b16 %v266
    %v303 = vunpack.c.l.b16 %v267
    %v304 = vpack.c.b16 %v289, %v288
    %v305 = vpack.c.b16 %v291, %v290
    %v306 = vpack.c.b16 %v293, %v292
    %v307 = vpack.c.b16 %v295, %v294
    %v308 = vpack.c.b16 %v297, %v296
    %v309 = vpack.c.b16 %v299, %v298
    %v310 = vpack.c.b16 %v301, %v300
    %v311 = vpack.c.b16 %v303, %v302
    %320 = vmatpush.bf16.msra.mxu0 %v311
    %321 = vmatpush.bf16.msra.mxu0 %v310
    %322 = vmatpush.bf16.msra.mxu0 %v309
    %323 = vmatpush.bf16.msra.mxu0 %v308
    %324 = vmatpush.bf16.msra.mxu0 %v307
    %325 = vmatpush.bf16.msra.mxu0 %v306
    %326 = vmatpush.bf16.msra.mxu0 %v305
    %327 = vmatpush.bf16.msra.mxu0 %v304
    %328 = vmatmul.bf16.gmra.mxu0 %v251
    %v329 = vpop.f32.mrf.mxu0
    %v330 = vadd.f32 %v270, %v329
    %v331 = vpop.f32.mrf.mxu0
    %332 = vdwg.mxu0
    %v333 = vmax.f32 %v330, 0.0
    %v334 = vpack.c.bf16 %v333, %v333
    %v335 = vld [vmem:[#allocation8] sm:$0xf]
    %v336 = vld [vmem:[#allocation8 + $0x4] sm:$0xf]
    %v337 = vld [vmem:[#allocation8 + $0x8] sm:$0xf]
    %v338 = vld [vmem:[#allocation8 + $0xc] sm:$0xf]
    %v339 = vld [vmem:[#allocation8 + $0x10] sm:$0xf]
    %v340 = vld [vmem:[#allocation8 + $0x14] sm:$0xf]
    %v341 = vld [vmem:[#allocation8 + $0x18] sm:$0xf]
    %v342 = vld [vmem:[#allocation8 + $0x1c] sm:$0xf]
    %v343 = vld [vmem:[#allocation8 + $0x20] sm:$0xf]
    %v344 = vld [vmem:[#allocation8 + $0x24] sm:$0xf]
    %v345 = vld [vmem:[#allocation8 + $0x28] sm:$0xf]
    %v346 = vld [vmem:[#allocation8 + $0x2c] sm:$0xf]
    %v347 = vld [vmem:[#allocation8 + $0x30] sm:$0xf]
    %v348 = vld [vmem:[#allocation8 + $0x34] sm:$0xf]
    %v349 = vld [vmem:[#allocation8 + $0x38] sm:$0xf]
    %v350 = vld [vmem:[#allocation8 + $0x3c] sm:$0xf]
    %v351 = vld [vmem:[%s6] sm:$0x1]
    %v353 = vperm.slane %v351, 0
    %v371 = vunpack.c.l.b16 %v335
    %v372 = vunpack.c.l.b16 %v336
    %v373 = vunpack.c.l.b16 %v337
    %v374 = vunpack.c.l.b16 %v338
    %v375 = vunpack.c.l.b16 %v339
    %v376 = vunpack.c.l.b16 %v340
    %v377 = vunpack.c.l.b16 %v341
    %v378 = vunpack.c.l.b16 %v342
    %v379 = vunpack.c.l.b16 %v343
    %v380 = vunpack.c.l.b16 %v344
    %v381 = vunpack.c.l.b16 %v345
    %v382 = vunpack.c.l.b16 %v346
    %v383 = vunpack.c.l.b16 %v347
    %v384 = vunpack.c.l.b16 %v348
    %v385 = vunpack.c.l.b16 %v349
    %v386 = vunpack.c.l.b16 %v350
    %v387 = vpack.c.b16 %v372, %v371
    %v388 = vpack.c.b16 %v374, %v373
    %v389 = vpack.c.b16 %v376, %v375
    %v390 = vpack.c.b16 %v378, %v377
    %v391 = vpack.c.b16 %v380, %v379
    %v392 = vpack.c.b16 %v382, %v381
    %v393 = vpack.c.b16 %v384, %v383
    %v394 = vpack.c.b16 %v386, %v385
    %403 = vmatpush.bf16.msra.mxu0 %v394
    %404 = vmatpush.bf16.msra.mxu0 %v393
    %405 = vmatpush.bf16.msra.mxu0 %v392
    %406 = vmatpush.bf16.msra.mxu0 %v391
    %407 = vmatpush.bf16.msra.mxu0 %v390
    %408 = vmatpush.bf16.msra.mxu0 %v389
    %409 = vmatpush.bf16.msra.mxu0 %v388
    %410 = vmatpush.bf16.msra.mxu0 %v387
    %411 = vmatmul.bf16.gmra.mxu0 %v334
    %v412 = vpop.f32.mrf.mxu0
    %v413 = vadd.f32 %v353, %v412
    %v414 = vpop.f32.mrf.mxu0
    %415 = vdwg.mxu0
    %v416 = vlaneseq
    %v417 = vand.u32 %v416, 127
    %vm418 = vcmp.lt.s32.totalorder %v417, 64
    %v419 = vmul.f32 %v413, 1.442695
    %v420 = vpow.pop %v419
    %v421 = vsel %vm418, %v413, %v420
    %422 = vst [vmem:[#allocation10] sm:$0xff] %v421
    // Predicated region
    $region46: #{tpu_custom_call.1} parent=1 // pred_check
      _
    $region47: #{tpu_custom_call.1} parent=1 // pred_check_branch
      %424 = sbr.rel (0) target = $region49
    $region48: #{tpu_custom_call.1} parent=1 // pred_region
      %426 = vsyncadd [#allocation4], 0
      %s428 = sshll.u32 [#allocation10], 4
      %s429 = int_to_ptr.vmem [resolvable:$true] %s428
      %s430 = sshll.u32 %s7, 4
      %s431 = int_to_ptr.hbm [resolvable:$true] %s430
      %433 = dma.vmem_to_hbm [thread:$0]  %s429, 128, %s431, [#allocation4]
    $region49: #{tpu_custom_call.1} parent=1 // pred_fallthru
      _
    // Predicated region
    $region50: #{tpu_custom_call.1} parent=1 // pred_check
      _
    $region51: #{tpu_custom_call.1} parent=1 // pred_check_branch
      %435 = sbr.rel (0) target = $region53
    $region52: #{tpu_custom_call.1} parent=1 // pred_region
      %437 = dma.done [#allocation4], 128
    $region53: #{tpu_custom_call.1} parent=1 // pred_fallthru
      _
    %438 = vsyncpa [#allocation3], 1
    %439 = vsyncpa [#allocation6], 1
    %440 = vsyncpa [#allocation9], 1
    %441 = vsyncpa [#allocation4], 1

</llo_original>
